<compile_context>
chip_gen: v7x
topology: tpu7x:2x2x1
jax: 0.10.0
libtpu: 0.0.40
codegen_flags: <defaults>
</compile_context>

<pallas_src>
import functools

import jax
import jax.numpy as jnp
from jax import lax
from jax.experimental import pallas as pl
from jax.experimental.pallas import tpu as pltpu


def _round_up(n, m):
    return ((n + m - 1) // m) * m


def _mlp_kernel(num_hidden, mxu_dtype, x_ref, *refs):
    """refs = (w0, b0, ..., w_{H-1}, b_{H-1}, w_last, b_last, out_ref).

    x_ref:   (tile_b, in_dim)                       -- natural layout block of x
    hidden:  h = relu(W_i @ h + b_i)                -- W_i is (out_pad_i, in_pad_i), h is
                                                        batch-on-lanes (features, tile_b)
    final:   out = sum_k w_last[k] * h[k, :] + b    -- VPU mul + XLU sublane reduce
    """
    out_ref = refs[-1]
    params = refs[:-1]

    if num_hidden == 0:
        # Degenerate config: single Linear(input_dim -> 1).
        w_last = params[0][...].astype(jnp.float32)           # (in_dim, 1)
        b_last = params[1][...]                                # (1, 1)
        out = lax.dot_general(
            w_last, x_ref[...].astype(jnp.float32),
            dimension_numbers=(((0,), (1,)), ((), ())),
            preferred_element_type=jnp.float32) + b_last       # (1, tile_b)
        out_ref[...] = out.reshape(out_ref.shape).astype(out_ref.dtype)
        return

    # ---- layer 0: contract in_dim of both operands -> batch-on-lanes activations ----
    x = x_ref[...].astype(mxu_dtype)                           # (tile_b, in_dim)
    w0 = params[0][...]                                        # (out_pad0, in_dim), mxu_dtype
    b0 = params[1][...]                                        # (out_pad0, 1), f32
    h = lax.dot_general(
        w0, x, dimension_numbers=(((1,), (1,)), ((), ())),
        preferred_element_type=jnp.float32) + b0               # (out_pad0, tile_b)
    h = jnp.maximum(h, 0.0)                                    # ReLU

    # ---- remaining hidden layers (standard MXU dot, batch stays on lanes) ----
    for i in range(1, num_hidden):
        w = params[2 * i][...]                                 # (out_pad_i, in_pad_i), mxu_dtype
        b = params[2 * i + 1][...]                             # (out_pad_i, 1), f32
        h = jnp.dot(w, h.astype(mxu_dtype),
                    preferred_element_type=jnp.float32) + b
        h = jnp.maximum(h, 0.0)

    # ---- final (hidden -> 1) layer on VPU + XLU (MXU pass with N=1 not worth it) ----
    w_last = params[2 * num_hidden][...]                       # (hid_pad, 1), f32
    b_last = params[2 * num_hidden + 1][...]                   # (1, 1), f32
    out = jnp.sum(h * w_last, axis=0, keepdims=True) + b_last  # (1, tile_b)

    out_ref[...] = out.reshape(out_ref.shape).astype(out_ref.dtype)


def _prepare_params(weights, biases, *, mxu_dtype=jnp.bfloat16, hidden_pad_to=128):
    """weights[i]: (in_i, out_i); biases[i]: (1, out_i)   (math layout x @ W + b).

    Returns kernel params, transposed + zero-padded, hidden weights pre-cast to mxu_dtype:
      hidden layer i:  W (out_pad_i, in_pad_i) mxu_dtype, b (out_pad_i, 1) f32
      final layer:     w (hid_pad, 1) f32,               b (1, 1) f32
    Zero padding is exact: padded units are relu(0 + 0) = 0 and hit zero weights downstream.
    """
    num_hidden = len(weights) - 1
    kparams = []
    prev_pad = weights[0].shape[0]                      # input_dim (not padded)
    for i in range(num_hidden):
        w, b = weights[i], biases[i]
        in_dim, out_dim = w.shape
        out_pad = _round_up(out_dim, hidden_pad_to)
        wt = (jnp.zeros((out_pad, prev_pad), jnp.float32)
              .at[:out_dim, :in_dim].set(w.T.astype(jnp.float32))
              .astype(mxu_dtype))                       # pre-cast ONCE (constant across steps)
        bt = jnp.zeros((out_pad, 1), jnp.float32).at[:out_dim, 0].set(
            b.reshape(-1).astype(jnp.float32))
        kparams += [wt, bt]
        prev_pad = out_pad
    w_last, b_last = weights[-1], biases[-1]            # (hid, 1), (1, 1)
    wl = jnp.zeros((prev_pad, 1), jnp.float32).at[:w_last.shape[0], :].set(
        w_last.astype(jnp.float32))
    bl = b_last.reshape(1, 1).astype(jnp.float32)
    kparams += [wl, bl]
    return kparams


def mlp_forward(x, weights, biases, *, batch_tile=4096, mxu_dtype=jnp.bfloat16):
    """x: (B, input_dim). weights[i]: (in_i, out_i). biases[i]: (1, out_i).

    Returns (B, 1) float32, same forward semantics as the torch MLP.
    mxu_dtype=jnp.bfloat16 (default): bf16 MXU operands, f32 accumulation.
    mxu_dtype=jnp.float32: bit-accurate path for verification.
    """
    B, in_dim = x.shape
    num_hidden = len(weights) - 1
    assert batch_tile % 128 == 0, "batch_tile must be a multiple of 128"

    # Tile choice: at least 128 lanes, as large as batch_tile allows (amortizes the
    # ~0.35us per-grid-step overhead).  Once the batch is big enough, prefer >=2
    # parallel tiles so the grid axis shards across both v7x TensorCores.
    B128 = _round_up(max(B, 1), 128)
    tile_b = min(batch_tile, B128)
    if tile_b == B128 and B128 >= 512:
        tile_b = _round_up((B128 + 1) // 2, 128)
    B_pad = _round_up(B128, tile_b)
    num_tiles = B_pad // tile_b

    # Row-only zero pad of the batch remainder (no transpose, no-op when aligned).
    x_in = x
    if B_pad != B:
        x_in = jnp.pad(x_in, ((0, B_pad - B), (0, 0)))

    kparams = _prepare_params(weights, biases, mxu_dtype=mxu_dtype)

    # x is tiled along the batch (sublane) axis in its natural layout; all params are
    # single whole blocks with a constant index_map (stay resident across grid steps).
    in_specs = [pl.BlockSpec((tile_b, in_dim), lambda i: (i, 0))]
    for p in kparams:
        in_specs.append(pl.BlockSpec(p.shape, lambda i: (0, 0)))

    # Lane-dense output: (1, B_pad) array in (1, tile_b) blocks.
    out_spec = pl.BlockSpec((1, tile_b), lambda i: (0, i))

    # Advisory cost estimate for XLA scheduling.
    hidden_pads = [kparams[2 * i].shape[0] for i in range(num_hidden)]
    dims = [in_dim] + hidden_pads + [1]
    flops = int(2 * B_pad * sum(dims[i] * dims[i + 1] for i in range(len(dims) - 1)))
    param_bytes = int(sum(int(p.size) * p.dtype.itemsize for p in kparams))
    bytes_accessed = int(int(x_in.size) * x_in.dtype.itemsize + B_pad * 4 + param_bytes)

    kernel = functools.partial(_mlp_kernel, num_hidden, mxu_dtype)

    out = pl.pallas_call(
        kernel,
        out_shape=jax.ShapeDtypeStruct((1, B_pad), jnp.float32),
        grid_spec=pltpu.PrefetchScalarGridSpec(
            num_scalar_prefetch=0,
            grid=(num_tiles,),
            in_specs=in_specs,
            out_specs=out_spec,
        ),
        compiler_params=pltpu.CompilerParams(
            dimension_semantics=("parallel",),
        ),
        cost_estimate=pl.CostEstimate(
            flops=flops, transcendentals=0, bytes_accessed=bytes_accessed),
    )(x_in, *kparams)

    # (1, B_pad) flattens to batch order; drop padded rows.
    return out.reshape(B_pad, 1)[:B]


def init_mlp_params(key, input_dim, num_hidden_layers, hidden_dims):
    """Deterministic init matching the torch module's layer shapes.

    Returns weights as (in, out) and biases as (1, out) (math layout x @ W + b)."""
    if isinstance(hidden_dims, int):
        hidden_dims = [hidden_dims] * num_hidden_layers
    dims = [input_dim] + list(hidden_dims) + [1]
    weights, biases = [], []
    for i in range(len(dims) - 1):
        fan_in, fan_out = dims[i], dims[i + 1]
        key, kw, kb = jax.random.split(key, 3)
        bound = 1.0 / jnp.sqrt(fan_in)  # same bound as torch.nn.Linear default init
        w = jax.random.uniform(kw, (fan_in, fan_out), jnp.float32, -bound, bound)
        b = jax.random.uniform(kb, (1, fan_out), jnp.float32, -bound, bound)
        weights.append(w)
        biases.append(b)
    return weights, biases


def mlp_reference(x, weights, biases):
    """Plain-JAX reference of the same forward."""
    h = x
    for i, (w, b) in enumerate(zip(weights, biases)):
        h = h @ w + b
        if i < len(weights) - 1:
            h = jnp.maximum(h, 0.0)
    return h


if __name__ == "__main__":
    key = jax.random.PRNGKey(0)

    # Small shapes consistent with the module's forward: x (B, input_dim).
    B, input_dim, num_hidden_layers, hidden_dims = 16, 32, 2, 64

    key, kx, kp = jax.random.split(key, 3)
    x = jax.random.normal(kx, (B, input_dim), jnp.float32)
    weights, biases = init_mlp_params(kp, input_dim, num_hidden_layers, hidden_dims)

    ref = mlp_reference(x, weights, biases)

    # f32 MXU path: tight check against the plain-JAX reference.
    out_f32 = jax.block_until_ready(mlp_forward(x, weights, biases, mxu_dtype=jnp.float32))
    assert out_f32.shape == (B, 1), out_f32.shape
    assert jnp.allclose(out_f32, ref, atol=1e-4, rtol=1e-4), float(jnp.abs(out_f32 - ref).max())

    # Default path (bf16 MXU operands, f32 accumulation): looser tolerance.
    out_bf16 = jax.block_until_ready(mlp_forward(x, weights, biases))
    assert out_bf16.shape == (B, 1), out_bf16.shape
    assert jnp.allclose(out_bf16, ref, atol=5e-2, rtol=5e-2), float(jnp.abs(out_bf16 - ref).max())

    # Batch not a multiple of 128: exercises the row-only zero-pad path.
    key, kx2 = jax.random.split(key)
    x2 = jax.random.normal(kx2, (300, input_dim), jnp.float32)
    out2 = jax.block_until_ready(mlp_forward(x2, weights, biases, mxu_dtype=jnp.float32))
    ref2 = mlp_reference(x2, weights, biases)
    assert out2.shape == (300, 1)
    assert jnp.allclose(out2, ref2, atol=1e-4, rtol=1e-4)

    # Larger batch: exercises the multi-tile ("parallel" grid, 2-TensorCore) path.
    key, kx3 = jax.random.split(key)
    x3 = jax.random.normal(kx3, (700, input_dim), jnp.float32)
    out3 = jax.block_until_ready(mlp_forward(x3, weights, biases, mxu_dtype=jnp.float32))
    ref3 = mlp_reference(x3, weights, biases)
    assert out3.shape == (700, 1)
    assert jnp.allclose(out3, ref3, atol=1e-4, rtol=1e-4)

    # TODO(synk): batch_norm=True and p_dropout>0 paths of the torch module are not part
    # of the mirrored default config and are not implemented here.
    print("KERNEL_OK")
</pallas_src>

<mosaic_0001>
module attributes {stable_mosaic.version = 11 : i64} {
  func.func @_mlp_kernel(%arg0: i32, %arg1: memref<128x32xf32, #tpu.memory_space<vmem>>, %arg2: memref<128x32xf32, #tpu.memory_space<vmem>>, %arg3: memref<128x1xf32, #tpu.memory_space<vmem>>, %arg4: memref<128x128xf32, #tpu.memory_space<vmem>>, %arg5: memref<128x1xf32, #tpu.memory_space<vmem>>, %arg6: memref<128x1xf32, #tpu.memory_space<vmem>>, %arg7: memref<1x1xf32, #tpu.memory_space<vmem>>, %arg8: memref<1x128xf32, #tpu.memory_space<vmem>>) attributes {dimension_semantics = [#tpu.dimension_semantics<parallel>], iteration_bounds = array<i64: 1>, scalar_prefetch = 0 : i64, scratch_operands = 0 : i64, tpu.core_type = #tpu.core_type<tc>, window_params = [{transform_indices = @transform_0, window_bounds = array<i64: 128, 32>}, {pipeline_mode = #tpu.pipeline_mode<synchronous>, transform_indices = @transform_1, window_bounds = array<i64: 128, 32>}, {pipeline_mode = #tpu.pipeline_mode<synchronous>, transform_indices = @transform_2, window_bounds = array<i64: 128, 1>}, {pipeline_mode = #tpu.pipeline_mode<synchronous>, transform_indices = @transform_3, window_bounds = array<i64: 128, 128>}, {pipeline_mode = #tpu.pipeline_mode<synchronous>, transform_indices = @transform_4, window_bounds = array<i64: 128, 1>}, {pipeline_mode = #tpu.pipeline_mode<synchronous>, transform_indices = @transform_5, window_bounds = array<i64: 128, 1>}, {pipeline_mode = #tpu.pipeline_mode<synchronous>, transform_indices = @transform_6, window_bounds = array<i64: 1, 1>}, {transform_indices = @transform_7, window_bounds = array<i64: 1, 128>}]} {
    %c0 = arith.constant 0 : index
    %c0_0 = arith.constant 0 : index
    %0 = vector.load %arg1[%c0, %c0_0] : memref<128x32xf32, #tpu.memory_space<vmem>>, vector<128x32xf32>
    %c0_1 = arith.constant 0 : index
    %c0_2 = arith.constant 0 : index
    %1 = vector.load %arg2[%c0_1, %c0_2] : memref<128x32xf32, #tpu.memory_space<vmem>>, vector<128x32xf32>
    %c0_3 = arith.constant 0 : index
    %c0_4 = arith.constant 0 : index
    %2 = vector.load %arg3[%c0_3, %c0_4] : memref<128x1xf32, #tpu.memory_space<vmem>>, vector<128x1xf32>
    %cst = arith.constant dense<0.000000e+00> : vector<128x128xf32>
    %3 = tpu.matmul %1, %0, %cst {dimension_numbers = #tpu.dot_dimension_numbers<[1], [1], [0], [0], [0, 0, 1, 0], [], []>} : vector<128x32xf32>, vector<128x32xf32>, vector<128x128xf32> -> vector<128x128xf32>
    %4 = vector.broadcast %2 : vector<128x1xf32> to vector<128x128xf32>
    %5 = arith.addf %3, %4 : vector<128x128xf32>
    %cst_5 = arith.constant 0.000000e+00 : f32
    %6 = vector.broadcast %cst_5 : f32 to vector<128x128xf32>
    %7 = arith.maximumf %5, %6 : vector<128x128xf32>
    %c0_6 = arith.constant 0 : index
    %c0_7 = arith.constant 0 : index
    %8 = vector.load %arg4[%c0_6, %c0_7] : memref<128x128xf32, #tpu.memory_space<vmem>>, vector<128x128xf32>
    %c0_8 = arith.constant 0 : index
    %c0_9 = arith.constant 0 : index
    %9 = vector.load %arg5[%c0_8, %c0_9] : memref<128x1xf32, #tpu.memory_space<vmem>>, vector<128x1xf32>
    %cst_10 = arith.constant dense<0.000000e+00> : vector<128x128xf32>
    %10 = tpu.matmul %8, %7, %cst_10 {dimension_numbers = #tpu.dot_dimension_numbers<[1], [0], [0], [1], [0, 0, 1, 1], [], []>} : vector<128x128xf32>, vector<128x128xf32>, vector<128x128xf32> -> vector<128x128xf32>
    %11 = vector.broadcast %9 : vector<128x1xf32> to vector<128x128xf32>
    %12 = arith.addf %10, %11 : vector<128x128xf32>
    %cst_11 = arith.constant 0.000000e+00 : f32
    %13 = vector.broadcast %cst_11 : f32 to vector<128x128xf32>
    %14 = arith.maximumf %12, %13 : vector<128x128xf32>
    %c0_12 = arith.constant 0 : index
    %c0_13 = arith.constant 0 : index
    %15 = vector.load %arg6[%c0_12, %c0_13] : memref<128x1xf32, #tpu.memory_space<vmem>>, vector<128x1xf32>
    %c0_14 = arith.constant 0 : index
    %c0_15 = arith.constant 0 : index
    %16 = vector.load %arg7[%c0_14, %c0_15] : memref<1x1xf32, #tpu.memory_space<vmem>>, vector<1x1xf32>
    %17 = vector.broadcast %15 : vector<128x1xf32> to vector<128x128xf32>
    %18 = arith.mulf %14, %17 : vector<128x128xf32>
    %cst_16 = arith.constant dense<0.000000e+00> : vector<128xf32>
    %19 = vector.multi_reduction <add>, %18, %cst_16 [0] : vector<128x128xf32> to vector<128xf32>
    %20 = vector.shape_cast %19 : vector<128xf32> to vector<1x128xf32>
    %21 = vector.broadcast %16 : vector<1x1xf32> to vector<1x128xf32>
    %22 = arith.addf %20, %21 : vector<1x128xf32>
    %c0_17 = arith.constant 0 : index
    %c0_18 = arith.constant 0 : index
    %23 = vector.load %arg8[%c0_17, %c0_18] : memref<1x128xf32, #tpu.memory_space<vmem>>, vector<1x128xf32>
    tpu.vector_store %arg8[%c0_17, %c0_18], %22 {strides = array<i32>} : memref<1x128xf32, #tpu.memory_space<vmem>>, vector<1x128xf32>,
    return
  }
  func.func @transform_0(%arg0: i32) -> (i32, i32) {
    %c0_i32 = arith.constant 0 : i32
    %c0_i32_0 = arith.constant 0 : i32
    return %arg0, %c0_i32 : i32, i32
  }
  func.func @transform_1(%arg0: i32) -> (i32, i32) {
    %c0_i32 = arith.constant 0 : i32
    %c0_i32_0 = arith.constant 0 : i32
    %c0_i32_1 = arith.constant 0 : i32
    return %c0_i32, %c0_i32_0 : i32, i32
  }
  func.func @transform_2(%arg0: i32) -> (i32, i32) {
    %c0_i32 = arith.constant 0 : i32
    %c0_i32_0 = arith.constant 0 : i32
    %c0_i32_1 = arith.constant 0 : i32
    return %c0_i32, %c0_i32_0 : i32, i32
  }
  func.func @transform_3(%arg0: i32) -> (i32, i32) {
    %c0_i32 = arith.constant 0 : i32
    %c0_i32_0 = arith.constant 0 : i32
    %c0_i32_1 = arith.constant 0 : i32
    return %c0_i32, %c0_i32_0 : i32, i32
  }
  func.func @transform_4(%arg0: i32) -> (i32, i32) {
    %c0_i32 = arith.constant 0 : i32
    %c0_i32_0 = arith.constant 0 : i32
    %c0_i32_1 = arith.constant 0 : i32
    return %c0_i32, %c0_i32_0 : i32, i32
  }
  func.func @transform_5(%arg0: i32) -> (i32, i32) {
    %c0_i32 = arith.constant 0 : i32
    %c0_i32_0 = arith.constant 0 : i32
    %c0_i32_1 = arith.constant 0 : i32
    return %c0_i32, %c0_i32_0 : i32, i32
  }
  func.func @transform_6(%arg0: i32) -> (i32, i32) {
    %c0_i32 = arith.constant 0 : i32
    %c0_i32_0 = arith.constant 0 : i32
    %c0_i32_1 = arith.constant 0 : i32
    return %c0_i32, %c0_i32_0 : i32, i32
  }
  func.func @transform_7(%arg0: i32) -> (i32, i32) {
    %c0_i32 = arith.constant 0 : i32
    %c0_i32_0 = arith.constant 0 : i32
    return %c0_i32, %arg0 : i32, i32
  }
}

</mosaic_0001>

<llo_original>
// kernel: tpu_custom_call.1
$region0: #{tpu_custom_call.1}
  #allocation0 [shape = 'u32[]', space=smem, size = 0x4, offset = 0x4, fixed_abs, tag = 'smem constant byte address 0x4 - core index']
  #allocation1 [shape = 'u32[144,128]{1,0:T(1,128)}', space=vmem, size = 0x12000, scoped, tag = 'internal scratch']
  #allocation2 [shape = 'f32[1,1]{1,0:T(1,128)S(1)}', space=vmem, size = 0x200, scoped, tag = 'scoped memory for tpu_custom_call.1']
  %s0 = inlined_call_operand.vmem [shape: f32[128,32], index: 0, kind: input, shape index: {}]
  %s1 = inlined_call_operand.vmem [shape: f32[128,32], index: 1, kind: input, shape index: {}]
  %s2 = inlined_call_operand.vmem [shape: f32[128,1], index: 2, kind: input, shape index: {}]
  %s3 = inlined_call_operand.vmem [shape: f32[128,128], index: 3, kind: input, shape index: {}]
  %s4 = inlined_call_operand.vmem [shape: f32[128,1], index: 4, kind: input, shape index: {}]
  %s5 = inlined_call_operand.vmem [shape: f32[128,1], index: 5, kind: input, shape index: {}]
  %s6 = inlined_call_operand.<no memory space> [shape: f32[1,1], index: 6, kind: input, shape index: {}]
  %s7 = inlined_call_operand.hbm [shape: f32[1,128], index: 7, kind: output, shape index: {}]
  %s8 = sld [smem:[#allocation0]]
  $region38: #{tpu_custom_call.1} parent=0
    _
  %s10 = ssub.s32 1, %s8
  %s11 = scalar_select 0, %s10, %s8
  %v12 = vstv %s6
  %13 = vst [vmem:[#allocation2] sm:$0x1] %v12
  $region1: #{tpu_custom_call.1} parent=0
    #allocation3 [shape = 'u8[512]{0}', space=vmem, size = 0x400, scoped, tag = 'output window, operand 0, single buffered']
    #allocation4 [shape = 's32[1]{0}', space=sflag, size = 0x4, scoped, tag = 'scoped memory for tpu_custom_call.1']
    %14 = vsyncpa [#allocation4], 0
    // Predicated region
    $region2: #{tpu_custom_call.1} parent=1 // pred_check
      _
    $region3: #{tpu_custom_call.1} parent=1 // pred_check_branch
      %16 = sbr.rel (0) target = $region5
    $region4: #{tpu_custom_call.1} parent=1 // pred_region
      _
    $region5: #{tpu_custom_call.1} parent=1 // pred_fallthru
      _
    // Predicated region
    $region6: #{tpu_custom_call.1} parent=1 // pred_check
      _
    $region7: #{tpu_custom_call.1} parent=1 // pred_check_branch
      %18 = sbr.rel (0) target = $region9
    $region8: #{tpu_custom_call.1} parent=1 // pred_region
      _
    $region9: #{tpu_custom_call.1} parent=1 // pred_fallthru
      _
    // Predicated region
    $region10: #{tpu_custom_call.1} parent=1 // pred_check
      _
    $region11: #{tpu_custom_call.1} parent=1 // pred_check_branch
      %20 = sbr.rel (0) target = $region13
    $region12: #{tpu_custom_call.1} parent=1 // pred_region
      _
    $region13: #{tpu_custom_call.1} parent=1 // pred_fallthru
      _
    // Predicated region
    $region14: #{tpu_custom_call.1} parent=1 // pred_check
      _
    $region15: #{tpu_custom_call.1} parent=1 // pred_check_branch
      %22 = sbr.rel (0) target = $region17
    $region16: #{tpu_custom_call.1} parent=1 // pred_region
      _
    $region17: #{tpu_custom_call.1} parent=1 // pred_fallthru
      _
    // Predicated region
    $region18: #{tpu_custom_call.1} parent=1 // pred_check
      _
    $region19: #{tpu_custom_call.1} parent=1 // pred_check_branch
      %24 = sbr.rel (0) target = $region21
    $region20: #{tpu_custom_call.1} parent=1 // pred_region
      _
    $region21: #{tpu_custom_call.1} parent=1 // pred_fallthru
      _
    // Predicated region
    $region22: #{tpu_custom_call.1} parent=1 // pred_check
      _
    $region23: #{tpu_custom_call.1} parent=1 // pred_check_branch
      %26 = sbr.rel (0) target = $region25
    $region24: #{tpu_custom_call.1} parent=1 // pred_region
      _
    $region25: #{tpu_custom_call.1} parent=1 // pred_fallthru
      _
    // Predicated region
    $region26: #{tpu_custom_call.1} parent=1 // pred_check
      _
    $region27: #{tpu_custom_call.1} parent=1 // pred_check_branch
      %28 = sbr.rel (0) target = $region29
    $region28: #{tpu_custom_call.1} parent=1 // pred_region
      _
    $region29: #{tpu_custom_call.1} parent=1 // pred_fallthru
      _
    %v29 = vld [vmem:[%s0] sm:$0xff]
    %v30 = vld [vmem:[%s0 + $0x8] sm:$0xff]
    %v31 = vld [vmem:[%s0 + $0x10] sm:$0xff]
    %v32 = vld [vmem:[%s0 + $0x18] sm:$0xff]
    %v33 = vld [vmem:[%s0 + $0x20] sm:$0xff]
    %v34 = vld [vmem:[%s0 + $0x28] sm:$0xff]
    %v35 = vld [vmem:[%s0 + $0x30] sm:$0xff]
    %v36 = vld [vmem:[%s0 + $0x38] sm:$0xff]
    %v37 = vld [vmem:[%s0 + $0x40] sm:$0xff]
    %v38 = vld [vmem:[%s0 + $0x48] sm:$0xff]
    %v39 = vld [vmem:[%s0 + $0x50] sm:$0xff]
    %v40 = vld [vmem:[%s0 + $0x58] sm:$0xff]
    %v41 = vld [vmem:[%s0 + $0x60] sm:$0xff]
    %v42 = vld [vmem:[%s0 + $0x68] sm:$0xff]
    %v43 = vld [vmem:[%s0 + $0x70] sm:$0xff]
    %v44 = vld [vmem:[%s0 + $0x78] sm:$0xff]
    %v45 = vld [vmem:[%s1] sm:$0xff]
    %v46 = vld [vmem:[%s1 + $0x8] sm:$0xff]
    %v47 = vld [vmem:[%s1 + $0x10] sm:$0xff]
    %v48 = vld [vmem:[%s1 + $0x18] sm:$0xff]
    %v49 = vld [vmem:[%s1 + $0x20] sm:$0xff]
    %v50 = vld [vmem:[%s1 + $0x28] sm:$0xff]
    %v51 = vld [vmem:[%s1 + $0x30] sm:$0xff]
    %v52 = vld [vmem:[%s1 + $0x38] sm:$0xff]
    %v53 = vld [vmem:[%s1 + $0x40] sm:$0xff]
    %v54 = vld [vmem:[%s1 + $0x48] sm:$0xff]
    %v55 = vld [vmem:[%s1 + $0x50] sm:$0xff]
    %v56 = vld [vmem:[%s1 + $0x58] sm:$0xff]
    %v57 = vld [vmem:[%s1 + $0x60] sm:$0xff]
    %v58 = vld [vmem:[%s1 + $0x68] sm:$0xff]
    %v59 = vld [vmem:[%s1 + $0x70] sm:$0xff]
    %v60 = vld [vmem:[%s1 + $0x78] sm:$0xff]
    %v61 = vld [vmem:[%s2] sm:$0xff]
    %v62 = vld [vmem:[%s2 + $0x8] sm:$0xff]
    %v63 = vld [vmem:[%s2 + $0x10] sm:$0xff]
    %v64 = vld [vmem:[%s2 + $0x18] sm:$0xff]
    %v65 = vld [vmem:[%s2 + $0x20] sm:$0xff]
    %v66 = vld [vmem:[%s2 + $0x28] sm:$0xff]
    %v67 = vld [vmem:[%s2 + $0x30] sm:$0xff]
    %v68 = vld [vmem:[%s2 + $0x38] sm:$0xff]
    %v69 = vld [vmem:[%s2 + $0x40] sm:$0xff]
    %v70 = vld [vmem:[%s2 + $0x48] sm:$0xff]
    %v71 = vld [vmem:[%s2 + $0x50] sm:$0xff]
    %v72 = vld [vmem:[%s2 + $0x58] sm:$0xff]
    %v73 = vld [vmem:[%s2 + $0x60] sm:$0xff]
    %v74 = vld [vmem:[%s2 + $0x68] sm:$0xff]
    %v75 = vld [vmem:[%s2 + $0x70] sm:$0xff]
    %v76 = vld [vmem:[%s2 + $0x78] sm:$0xff]
    %78 = vset.pattern.permute.xlu0 0
    %79 = vperm.xlu0 %78, %v61
    %v80 = vpop.permute.xlu0 %79
    %83 = vset.pattern.permute.xlu0 0
    %84 = vperm.xlu0 %83, %v62
    %v85 = vpop.permute.xlu0 %84
    %88 = vset.pattern.permute.xlu0 0
    %89 = vperm.xlu0 %88, %v63
    %v90 = vpop.permute.xlu0 %89
    %93 = vset.pattern.permute.xlu0 0
    %94 = vperm.xlu0 %93, %v64
    %v95 = vpop.permute.xlu0 %94
    %98 = vset.pattern.permute.xlu0 0
    %99 = vperm.xlu0 %98, %v65
    %v100 = vpop.permute.xlu0 %99
    %103 = vset.pattern.permute.xlu0 0
    %104 = vperm.xlu0 %103, %v66
    %v105 = vpop.permute.xlu0 %104
    %108 = vset.pattern.permute.xlu0 0
    %109 = vperm.xlu0 %108, %v67
    %v110 = vpop.permute.xlu0 %109
    %113 = vset.pattern.permute.xlu0 0
    %114 = vperm.xlu0 %113, %v68
    %v115 = vpop.permute.xlu0 %114
    %118 = vset.pattern.permute.xlu0 0
    %119 = vperm.xlu0 %118, %v69
    %v120 = vpop.permute.xlu0 %119
    %123 = vset.pattern.permute.xlu0 0
    %124 = vperm.xlu0 %123, %v70
    %v125 = vpop.permute.xlu0 %124
    %128 = vset.pattern.permute.xlu0 0
    %129 = vperm.xlu0 %128, %v71
    %v130 = vpop.permute.xlu0 %129
    %133 = vset.pattern.permute.xlu0 0
    %134 = vperm.xlu0 %133, %v72
    %v135 = vpop.permute.xlu0 %134
    %138 = vset.pattern.permute.xlu0 0
    %139 = vperm.xlu0 %138, %v73
    %v140 = vpop.permute.xlu0 %139
    %143 = vset.pattern.permute.xlu0 0
    %144 = vperm.xlu0 %143, %v74
    %v145 = vpop.permute.xlu0 %144
    %148 = vset.pattern.permute.xlu0 0
    %149 = vperm.xlu0 %148, %v75
    %v150 = vpop.permute.xlu0 %149
    %153 = vset.pattern.permute.xlu0 0
    %154 = vperm.xlu0 %153, %v76
    %v155 = vpop.permute.xlu0 %154
    %vm157 = vcmask 261120
    %v159 = vsel %vm157, %v45, 0
    %v162 = vsel %vm157, %v46, 0
    %v165 = vsel %vm157, %v47, 0
    %v168 = vsel %vm157, %v48, 0
    %v171 = vsel %vm157, %v49, 0
    %v174 = vsel %vm157, %v50, 0
    %v177 = vsel %vm157, %v51, 0
    %v180 = vsel %vm157, %v52, 0
    %v183 = vsel %vm157, %v53, 0
    %v186 = vsel %vm157, %v54, 0
    %v189 = vsel %vm157, %v55, 0
    %v192 = vsel %vm157, %v56, 0
    %v195 = vsel %vm157, %v57, 0
    %v198 = vsel %vm157, %v58, 0
    %v201 = vsel %vm157, %v59, 0
    %v204 = vsel %vm157, %v60, 0
    %v207 = vsel %vm157, %v29, 0
    %v210 = vsel %vm157, %v30, 0
    %v213 = vsel %vm157, %v31, 0
    %v216 = vsel %vm157, %v32, 0
    %v219 = vsel %vm157, %v33, 0
    %v222 = vsel %vm157, %v34, 0
    %v225 = vsel %vm157, %v35, 0
    %v228 = vsel %vm157, %v36, 0
    %v231 = vsel %vm157, %v37, 0
    %v234 = vsel %vm157, %v38, 0
    %v237 = vsel %vm157, %v39, 0
    %v240 = vsel %vm157, %v40, 0
    %v243 = vsel %vm157, %v41, 0
    %v246 = vsel %vm157, %v42, 0
    %v249 = vsel %vm157, %v43, 0
    %v252 = vsel %vm157, %v44, 0
    %254 = vmatprep.subr.mxu0 0.0
    %255 = vmatpush1.xpose.msra.mxu0 %v207
    %256 = vmatprep.subr.mxu0 0.0
    %257 = vmatpush1.xpose.msra.mxu0 %v210
    %258 = vmatprep.subr.mxu0 0.0
    %259 = vmatpush1.xpose.msra.mxu0 %v213
    %260 = vmatprep.subr.mxu0 0.0
    %261 = vmatpush1.xpose.msra.mxu0 %v216
    %262 = vmatprep.subr.mxu0 0.0
    %263 = vmatpush1.xpose.msra.mxu0 %v219
    %264 = vmatprep.subr.mxu0 0.0
    %265 = vmatpush1.xpose.msra.mxu0 %v222
    %266 = vmatprep.subr.mxu0 0.0
    %267 = vmatpush1.xpose.msra.mxu0 %v225
    %268 = vmatprep.subr.mxu0 0.0
    %269 = vmatpush1.xpose.msra.mxu0 %v228
    %270 = vmatprep.subr.mxu0 0.0
    %271 = vmatpush1.xpose.msra.mxu0 %v231
    %272 = vmatprep.subr.mxu0 0.0
    %273 = vmatpush1.xpose.msra.mxu0 %v234
    %274 = vmatprep.subr.mxu0 0.0
    %275 = vmatpush1.xpose.msra.mxu0 %v237
    %276 = vmatprep.subr.mxu0 0.0
    %277 = vmatpush1.xpose.msra.mxu0 %v240
    %278 = vmatprep.subr.mxu0 0.0
    %279 = vmatpush1.xpose.msra.mxu0 %v243
    %280 = vmatprep.subr.mxu0 0.0
    %281 = vmatpush1.xpose.msra.mxu0 %v246
    %282 = vmatprep.subr.mxu0 0.0
    %283 = vmatpush1.xpose.msra.mxu0 %v249
    %284 = vmatprep.subr.mxu0 0.0
    %285 = vmatpush1.xpose.msra.mxu0 %v252
    %286 = vmatprep.subr.mxu0 0.0
    %287 = vmatpush1.xpose.msra.mxu0 0.0
    %288 = vmatprep.subr.mxu0 0.0
    %289 = vmatpush1.xpose.msra.mxu0 0.0
    %290 = vmatprep.subr.mxu0 0.0
    %291 = vmatpush1.xpose.msra.mxu0 0.0
    %292 = vmatprep.subr.mxu0 0.0
    %293 = vmatpush1.xpose.msra.mxu0 0.0
    %294 = vmatprep.subr.mxu0 0.0
    %295 = vmatpush1.xpose.msra.mxu0 0.0
    %296 = vmatprep.subr.mxu0 0.0
    %297 = vmatpush1.xpose.msra.mxu0 0.0
    %298 = vmatprep.subr.mxu0 0.0
    %299 = vmatpush1.xpose.msra.mxu0 0.0
    %300 = vmatprep.subr.mxu0 0.0
    %301 = vmatpush1.xpose.msra.mxu0 0.0
    %302 = vmatprep.subr.mxu0 0.0
    %303 = vmatpush1.xpose.msra.mxu0 0.0
    %304 = vmatprep.subr.mxu0 0.0
    %305 = vmatpush1.xpose.msra.mxu0 0.0
    %306 = vmatprep.subr.mxu0 0.0
    %307 = vmatpush1.xpose.msra.mxu0 0.0
    %308 = vmatprep.subr.mxu0 0.0
    %309 = vmatpush1.xpose.msra.mxu0 0.0
    %310 = vmatprep.subr.mxu0 0.0
    %311 = vmatpush1.xpose.msra.mxu0 0.0
    %312 = vmatprep.subr.mxu0 0.0
    %313 = vmatpush1.xpose.msra.mxu0 0.0
    %314 = vmatprep.subr.mxu0 0.0
    %315 = vmatpush1.xpose.msra.mxu0 0.0
    %316 = vmatprep.subr.mxu0 0.0
    %317 = vmatpush1.xpose.msra.mxu0 0.0
    %318 = vmatprep.mubr.f32.mxu0 0.0
    %319 = vmatmul.mubr.f32.gmra.mrb[0].mxu0 %v159
    %v320 = vpop.f32.mrb[0].mxu0
    %v321 = vadd.f32 %v80, %v320
    %v322 = vpop.f32.mrb[0].mxu0
    %323 = vmatprep.mubr.f32.mxu0 0.0
    %324 = vmatmul.mubr.f32.gmra.mrb[0].mxu0 %v162
    %v325 = vpop.f32.mrb[0].mxu0
    %v326 = vadd.f32 %v85, %v325
    %v327 = vpop.f32.mrb[0].mxu0
    %328 = vmatprep.mubr.f32.mxu0 0.0
    %329 = vmatmul.mubr.f32.gmra.mrb[0].mxu0 %v165
    %v330 = vpop.f32.mrb[0].mxu0
    %v331 = vadd.f32 %v90, %v330
    %v332 = vpop.f32.mrb[0].mxu0
    %333 = vmatprep.mubr.f32.mxu0 0.0
    %334 = vmatmul.mubr.f32.gmra.mrb[0].mxu0 %v168
    %v335 = vpop.f32.mrb[0].mxu0
    %v336 = vadd.f32 %v95, %v335
    %v337 = vpop.f32.mrb[0].mxu0
    %338 = vmatprep.mubr.f32.mxu0 0.0
    %339 = vmatmul.mubr.f32.gmra.mrb[0].mxu0 %v171
    %v340 = vpop.f32.mrb[0].mxu0
    %v341 = vadd.f32 %v100, %v340
    %v342 = vpop.f32.mrb[0].mxu0
    %343 = vmatprep.mubr.f32.mxu0 0.0
    %344 = vmatmul.mubr.f32.gmra.mrb[0].mxu0 %v174
    %v345 = vpop.f32.mrb[0].mxu0
    %v346 = vadd.f32 %v105, %v345
    %v347 = vpop.f32.mrb[0].mxu0
    %348 = vmatprep.mubr.f32.mxu0 0.0
    %349 = vmatmul.mubr.f32.gmra.mrb[0].mxu0 %v177
    %v350 = vpop.f32.mrb[0].mxu0
    %v351 = vadd.f32 %v110, %v350
    %v352 = vpop.f32.mrb[0].mxu0
    %353 = vmatprep.mubr.f32.mxu0 0.0
    %354 = vmatmul.mubr.f32.gmra.mrb[0].mxu0 %v180
    %v355 = vpop.f32.mrb[0].mxu0
    %v356 = vadd.f32 %v115, %v355
    %v357 = vpop.f32.mrb[0].mxu0
    %358 = vmatprep.mubr.f32.mxu0 0.0
    %359 = vmatmul.mubr.f32.gmra.mrb[0].mxu0 %v183
    %v360 = vpop.f32.mrb[0].mxu0
    %v361 = vadd.f32 %v120, %v360
    %v362 = vpop.f32.mrb[0].mxu0
    %363 = vmatprep.mubr.f32.mxu0 0.0
    %364 = vmatmul.mubr.f32.gmra.mrb[0].mxu0 %v186
    %v365 = vpop.f32.mrb[0].mxu0
    %v366 = vadd.f32 %v125, %v365
    %v367 = vpop.f32.mrb[0].mxu0
    %368 = vmatprep.mubr.f32.mxu0 0.0
    %369 = vmatmul.mubr.f32.gmra.mrb[0].mxu0 %v189
    %v370 = vpop.f32.mrb[0].mxu0
    %v371 = vadd.f32 %v130, %v370
    %v372 = vpop.f32.mrb[0].mxu0
    %373 = vmatprep.mubr.f32.mxu0 0.0
    %374 = vmatmul.mubr.f32.gmra.mrb[0].mxu0 %v192
    %v375 = vpop.f32.mrb[0].mxu0
    %v376 = vadd.f32 %v135, %v375
    %v377 = vpop.f32.mrb[0].mxu0
    %378 = vmatprep.mubr.f32.mxu0 0.0
    %379 = vmatmul.mubr.f32.gmra.mrb[0].mxu0 %v195
    %v380 = vpop.f32.mrb[0].mxu0
    %v381 = vadd.f32 %v140, %v380
    %v382 = vpop.f32.mrb[0].mxu0
    %383 = vmatprep.mubr.f32.mxu0 0.0
    %384 = vmatmul.mubr.f32.gmra.mrb[0].mxu0 %v198
    %v385 = vpop.f32.mrb[0].mxu0
    %v386 = vadd.f32 %v145, %v385
    %v387 = vpop.f32.mrb[0].mxu0
    %388 = vmatprep.mubr.f32.mxu0 0.0
    %389 = vmatmul.mubr.f32.gmra.mrb[0].mxu0 %v201
    %v390 = vpop.f32.mrb[0].mxu0
    %v391 = vadd.f32 %v150, %v390
    %v392 = vpop.f32.mrb[0].mxu0
    %393 = vmatprep.mubr.f32.mxu0 0.0
    %394 = vmatmul.mubr.f32.gmra.mrb[0].mxu0 %v204
    %v395 = vpop.f32.mrb[0].mxu0
    %v396 = vadd.f32 %v155, %v395
    %v397 = vpop.f32.mrb[0].mxu0
    %398 = vdwg.mxu0
    %v399 = vmax.f32 %v321, 0.0
    %v400 = vmax.f32 %v326, 0.0
    %v401 = vmax.f32 %v331, 0.0
    %v402 = vmax.f32 %v336, 0.0
    %v403 = vmax.f32 %v341, 0.0
    %v404 = vmax.f32 %v346, 0.0
    %v405 = vmax.f32 %v351, 0.0
    %v406 = vmax.f32 %v356, 0.0
    %v407 = vmax.f32 %v361, 0.0
    %v408 = vmax.f32 %v366, 0.0
    %v409 = vmax.f32 %v371, 0.0
    %v410 = vmax.f32 %v376, 0.0
    %v411 = vmax.f32 %v381, 0.0
    %v412 = vmax.f32 %v386, 0.0
    %v413 = vmax.f32 %v391, 0.0
    %v414 = vmax.f32 %v396, 0.0
    %v415 = vld [vmem:[%s3] sm:$0xff]
    %v416 = vld [vmem:[%s3 + $0x8] sm:$0xff]
    %v417 = vld [vmem:[%s3 + $0x10] sm:$0xff]
    %v418 = vld [vmem:[%s3 + $0x18] sm:$0xff]
    %v419 = vld [vmem:[%s3 + $0x20] sm:$0xff]
    %v420 = vld [vmem:[%s3 + $0x28] sm:$0xff]
    %v421 = vld [vmem:[%s3 + $0x30] sm:$0xff]
    %v422 = vld [vmem:[%s3 + $0x38] sm:$0xff]
    %v423 = vld [vmem:[%s3 + $0x40] sm:$0xff]
    %v424 = vld [vmem:[%s3 + $0x48] sm:$0xff]
    %v425 = vld [vmem:[%s3 + $0x50] sm:$0xff]
    %v426 = vld [vmem:[%s3 + $0x58] sm:$0xff]
    %v427 = vld [vmem:[%s3 + $0x60] sm:$0xff]
    %v428 = vld [vmem:[%s3 + $0x68] sm:$0xff]
    %v429 = vld [vmem:[%s3 + $0x70] sm:$0xff]
    %v430 = vld [vmem:[%s3 + $0x78] sm:$0xff]
    %v431 = vld [vmem:[%s4] sm:$0xff]
    %v432 = vld [vmem:[%s4 + $0x8] sm:$0xff]
    %v433 = vld [vmem:[%s4 + $0x10] sm:$0xff]
    %v434 = vld [vmem:[%s4 + $0x18] sm:$0xff]
    %v435 = vld [vmem:[%s4 + $0x20] sm:$0xff]
    %v436 = vld [vmem:[%s4 + $0x28] sm:$0xff]
    %v437 = vld [vmem:[%s4 + $0x30] sm:$0xff]
    %v438 = vld [vmem:[%s4 + $0x38] sm:$0xff]
    %v439 = vld [vmem:[%s4 + $0x40] sm:$0xff]
    %v440 = vld [vmem:[%s4 + $0x48] sm:$0xff]
    %v441 = vld [vmem:[%s4 + $0x50] sm:$0xff]
    %v442 = vld [vmem:[%s4 + $0x58] sm:$0xff]
    %v443 = vld [vmem:[%s4 + $0x60] sm:$0xff]
    %v444 = vld [vmem:[%s4 + $0x68] sm:$0xff]
    %v445 = vld [vmem:[%s4 + $0x70] sm:$0xff]
    %v446 = vld [vmem:[%s4 + $0x78] sm:$0xff]
    %448 = vset.pattern.permute.xlu0 0
    %449 = vperm.xlu0 %448, %v431
    %v450 = vpop.permute.xlu0 %449
    %453 = vset.pattern.permute.xlu0 0
    %454 = vperm.xlu0 %453, %v432
    %v455 = vpop.permute.xlu0 %454
    %458 = vset.pattern.permute.xlu0 0
    %459 = vperm.xlu0 %458, %v433
    %v460 = vpop.permute.xlu0 %459
    %463 = vset.pattern.permute.xlu0 0
    %464 = vperm.xlu0 %463, %v434
    %v465 = vpop.permute.xlu0 %464
    %468 = vset.pattern.permute.xlu0 0
    %469 = vperm.xlu0 %468, %v435
    %v470 = vpop.permute.xlu0 %469
    %473 = vset.pattern.permute.xlu0 0
    %474 = vperm.xlu0 %473, %v436
    %v475 = vpop.permute.xlu0 %474
    %478 = vset.pattern.permute.xlu0 0
    %479 = vperm.xlu0 %478, %v437
    %v480 = vpop.permute.xlu0 %479
    %483 = vset.pattern.permute.xlu0 0
    %484 = vperm.xlu0 %483, %v438
    %v485 = vpop.permute.xlu0 %484
    %488 = vset.pattern.permute.xlu0 0
    %489 = vperm.xlu0 %488, %v439
    %v490 = vpop.permute.xlu0 %489
    %493 = vset.pattern.permute.xlu0 0
    %494 = vperm.xlu0 %493, %v440
    %v495 = vpop.permute.xlu0 %494
    %498 = vset.pattern.permute.xlu0 0
    %499 = vperm.xlu0 %498, %v441
    %v500 = vpop.permute.xlu0 %499
    %503 = vset.pattern.permute.xlu0 0
    %504 = vperm.xlu0 %503, %v442
    %v505 = vpop.permute.xlu0 %504
    %508 = vset.pattern.permute.xlu0 0
    %509 = vperm.xlu0 %508, %v443
    %v510 = vpop.permute.xlu0 %509
    %513 = vset.pattern.permute.xlu0 0
    %514 = vperm.xlu0 %513, %v444
    %v515 = vpop.permute.xlu0 %514
    %518 = vset.pattern.permute.xlu0 0
    %519 = vperm.xlu0 %518, %v445
    %v520 = vpop.permute.xlu0 %519
    %523 = vset.pattern.permute.xlu0 0
    %524 = vperm.xlu0 %523, %v446
    %v525 = vpop.permute.xlu0 %524
    %527 = vmatprep.subr.mxu0 0.0
    %528 = vmatpush1.msra.mxu0 %v399
    %529 = vmatprep.subr.mxu0 0.0
    %530 = vmatpush1.msra.mxu0 %v400
    %531 = vmatprep.subr.mxu0 0.0
    %532 = vmatpush1.msra.mxu0 %v401
    %533 = vmatprep.subr.mxu0 0.0
    %534 = vmatpush1.msra.mxu0 %v402
    %535 = vmatprep.subr.mxu0 0.0
    %536 = vmatpush1.msra.mxu0 %v403
    %537 = vmatprep.subr.mxu0 0.0
    %538 = vmatpush1.msra.mxu0 %v404
    %539 = vmatprep.subr.mxu0 0.0
    %540 = vmatpush1.msra.mxu0 %v405
    %541 = vmatprep.subr.mxu0 0.0
    %542 = vmatpush1.msra.mxu0 %v406
    %543 = vmatprep.subr.mxu0 0.0
    %544 = vmatpush1.msra.mxu0 %v407
    %545 = vmatprep.subr.mxu0 0.0
    %546 = vmatpush1.msra.mxu0 %v408
    %547 = vmatprep.subr.mxu0 0.0
    %548 = vmatpush1.msra.mxu0 %v409
    %549 = vmatprep.subr.mxu0 0.0
    %550 = vmatpush1.msra.mxu0 %v410
    %551 = vmatprep.subr.mxu0 0.0
    %552 = vmatpush1.msra.mxu0 %v411
    %553 = vmatprep.subr.mxu0 0.0
    %554 = vmatpush1.msra.mxu0 %v412
    %555 = vmatprep.subr.mxu0 0.0
    %556 = vmatpush1.msra.mxu0 %v413
    %557 = vmatprep.subr.mxu0 0.0
    %558 = vmatpush1.msra.mxu0 %v414
    %559 = vmatprep.subr.mxu0 0.0
    %560 = vmatpush1.msra.mxu0 0.0
    %561 = vmatprep.subr.mxu0 0.0
    %562 = vmatpush1.msra.mxu0 0.0
    %563 = vmatprep.subr.mxu0 0.0
    %564 = vmatpush1.msra.mxu0 0.0
    %565 = vmatprep.subr.mxu0 0.0
    %566 = vmatpush1.msra.mxu0 0.0
    %567 = vmatprep.subr.mxu0 0.0
    %568 = vmatpush1.msra.mxu0 0.0
    %569 = vmatprep.subr.mxu0 0.0
    %570 = vmatpush1.msra.mxu0 0.0
    %571 = vmatprep.subr.mxu0 0.0
    %572 = vmatpush1.msra.mxu0 0.0
    %573 = vmatprep.subr.mxu0 0.0
    %574 = vmatpush1.msra.mxu0 0.0
    %575 = vmatprep.subr.mxu0 0.0
    %576 = vmatpush1.msra.mxu0 0.0
    %577 = vmatprep.subr.mxu0 0.0
    %578 = vmatpush1.msra.mxu0 0.0
    %579 = vmatprep.subr.mxu0 0.0
    %580 = vmatpush1.msra.mxu0 0.0
    %581 = vmatprep.subr.mxu0 0.0
    %582 = vmatpush1.msra.mxu0 0.0
    %583 = vmatprep.subr.mxu0 0.0
    %584 = vmatpush1.msra.mxu0 0.0
    %585 = vmatprep.subr.mxu0 0.0
    %586 = vmatpush1.msra.mxu0 0.0
    %587 = vmatprep.subr.mxu0 0.0
    %588 = vmatpush1.msra.mxu0 0.0
    %589 = vmatprep.subr.mxu0 0.0
    %590 = vmatpush1.msra.mxu0 0.0
    %591 = vmatprep.mubr.f32.mxu0 0.0
    %592 = vmatmul.mubr.f32.gmra.mrb[0].mxu0 %v415
    %v593 = vpop.f32.mrb[0].mxu0
    %v594 = vadd.f32 %v450, %v593
    %v595 = vpop.f32.mrb[0].mxu0
    %596 = vmatprep.mubr.f32.mxu0 0.0
    %597 = vmatmul.mubr.f32.gmra.mrb[0].mxu0 %v416
    %v598 = vpop.f32.mrb[0].mxu0
    %v599 = vadd.f32 %v455, %v598
    %v600 = vpop.f32.mrb[0].mxu0
    %601 = vmatprep.mubr.f32.mxu0 0.0
    %602 = vmatmul.mubr.f32.gmra.mrb[0].mxu0 %v417
    %v603 = vpop.f32.mrb[0].mxu0
    %v604 = vadd.f32 %v460, %v603
    %v605 = vpop.f32.mrb[0].mxu0
    %606 = vmatprep.mubr.f32.mxu0 0.0
    %607 = vmatmul.mubr.f32.gmra.mrb[0].mxu0 %v418
    %v608 = vpop.f32.mrb[0].mxu0
    %v609 = vadd.f32 %v465, %v608
    %v610 = vpop.f32.mrb[0].mxu0
    %611 = vmatprep.mubr.f32.mxu0 0.0
    %612 = vmatmul.mubr.f32.gmra.mrb[0].mxu0 %v419
    %v613 = vpop.f32.mrb[0].mxu0
    %v614 = vadd.f32 %v470, %v613
    %v615 = vpop.f32.mrb[0].mxu0
    %616 = vmatprep.mubr.f32.mxu0 0.0
    %617 = vmatmul.mubr.f32.gmra.mrb[0].mxu0 %v420
    %v618 = vpop.f32.mrb[0].mxu0
    %v619 = vadd.f32 %v475, %v618
    %v620 = vpop.f32.mrb[0].mxu0
    %621 = vmatprep.mubr.f32.mxu0 0.0
    %622 = vmatmul.mubr.f32.gmra.mrb[0].mxu0 %v421
    %v623 = vpop.f32.mrb[0].mxu0
    %v624 = vadd.f32 %v480, %v623
    %v625 = vpop.f32.mrb[0].mxu0
    %626 = vmatprep.mubr.f32.mxu0 0.0
    %627 = vmatmul.mubr.f32.gmra.mrb[0].mxu0 %v422
    %v628 = vpop.f32.mrb[0].mxu0
    %v629 = vadd.f32 %v485, %v628
    %v630 = vpop.f32.mrb[0].mxu0
    %631 = vmatprep.mubr.f32.mxu0 0.0
    %632 = vmatmul.mubr.f32.gmra.mrb[0].mxu0 %v423
    %v633 = vpop.f32.mrb[0].mxu0
    %v634 = vadd.f32 %v490, %v633
    %v635 = vpop.f32.mrb[0].mxu0
    %636 = vmatprep.mubr.f32.mxu0 0.0
    %637 = vmatmul.mubr.f32.gmra.mrb[0].mxu0 %v424
    %v638 = vpop.f32.mrb[0].mxu0
    %v639 = vadd.f32 %v495, %v638
    %v640 = vpop.f32.mrb[0].mxu0
    %641 = vmatprep.mubr.f32.mxu0 0.0
    %642 = vmatmul.mubr.f32.gmra.mrb[0].mxu0 %v425
    %v643 = vpop.f32.mrb[0].mxu0
    %v644 = vadd.f32 %v500, %v643
    %v645 = vpop.f32.mrb[0].mxu0
    %646 = vmatprep.mubr.f32.mxu0 0.0
    %647 = vmatmul.mubr.f32.gmra.mrb[0].mxu0 %v426
    %v648 = vpop.f32.mrb[0].mxu0
    %v649 = vadd.f32 %v505, %v648
    %v650 = vpop.f32.mrb[0].mxu0
    %651 = vmatprep.mubr.f32.mxu0 0.0
    %652 = vmatmul.mubr.f32.gmra.mrb[0].mxu0 %v427
    %v653 = vpop.f32.mrb[0].mxu0
    %v654 = vadd.f32 %v510, %v653
    %v655 = vpop.f32.mrb[0].mxu0
    %656 = vmatprep.mubr.f32.mxu0 0.0
    %657 = vmatmul.mubr.f32.gmra.mrb[0].mxu0 %v428
    %v658 = vpop.f32.mrb[0].mxu0
    %v659 = vadd.f32 %v515, %v658
    %v660 = vpop.f32.mrb[0].mxu0
    %661 = vmatprep.mubr.f32.mxu0 0.0
    %662 = vmatmul.mubr.f32.gmra.mrb[0].mxu0 %v429
    %v663 = vpop.f32.mrb[0].mxu0
    %v664 = vadd.f32 %v520, %v663
    %v665 = vpop.f32.mrb[0].mxu0
    %666 = vmatprep.mubr.f32.mxu0 0.0
    %667 = vmatmul.mubr.f32.gmra.mrb[0].mxu0 %v430
    %v668 = vpop.f32.mrb[0].mxu0
    %v669 = vadd.f32 %v525, %v668
    %v670 = vpop.f32.mrb[0].mxu0
    %671 = vdwg.mxu0
    %v672 = vmax.f32 %v594, 0.0
    %v673 = vmax.f32 %v599, 0.0
    %v674 = vmax.f32 %v604, 0.0
    %v675 = vmax.f32 %v609, 0.0
    %v676 = vmax.f32 %v614, 0.0
    %v677 = vmax.f32 %v619, 0.0
    %v678 = vmax.f32 %v624, 0.0
    %v679 = vmax.f32 %v629, 0.0
    %v680 = vmax.f32 %v634, 0.0
    %v681 = vmax.f32 %v639, 0.0
    %v682 = vmax.f32 %v644, 0.0
    %v683 = vmax.f32 %v649, 0.0
    %v684 = vmax.f32 %v654, 0.0
    %v685 = vmax.f32 %v659, 0.0
    %v686 = vmax.f32 %v664, 0.0
    %v687 = vmax.f32 %v669, 0.0
    %v688 = vld [vmem:[%s5] sm:$0xff]
    %v689 = vld [vmem:[%s5 + $0x8] sm:$0xff]
    %v690 = vld [vmem:[%s5 + $0x10] sm:$0xff]
    %v691 = vld [vmem:[%s5 + $0x18] sm:$0xff]
    %v692 = vld [vmem:[%s5 + $0x20] sm:$0xff]
    %v693 = vld [vmem:[%s5 + $0x28] sm:$0xff]
    %v694 = vld [vmem:[%s5 + $0x30] sm:$0xff]
    %v695 = vld [vmem:[%s5 + $0x38] sm:$0xff]
    %v696 = vld [vmem:[%s5 + $0x40] sm:$0xff]
    %v697 = vld [vmem:[%s5 + $0x48] sm:$0xff]
    %v698 = vld [vmem:[%s5 + $0x50] sm:$0xff]
    %v699 = vld [vmem:[%s5 + $0x58] sm:$0xff]
    %v700 = vld [vmem:[%s5 + $0x60] sm:$0xff]
    %v701 = vld [vmem:[%s5 + $0x68] sm:$0xff]
    %v702 = vld [vmem:[%s5 + $0x70] sm:$0xff]
    %v703 = vld [vmem:[%s5 + $0x78] sm:$0xff]
    %v704 = vld [vmem:[#allocation2] sm:$0x1]
    %706 = vset.pattern.permute.xlu0 0
    %707 = vperm.xlu0 %706, %v688
    %v708 = vpop.permute.xlu0 %707
    %711 = vset.pattern.permute.xlu0 0
    %712 = vperm.xlu0 %711, %v689
    %v713 = vpop.permute.xlu0 %712
    %716 = vset.pattern.permute.xlu0 0
    %717 = vperm.xlu0 %716, %v690
    %v718 = vpop.permute.xlu0 %717
    %721 = vset.pattern.permute.xlu0 0
    %722 = vperm.xlu0 %721, %v691
    %v723 = vpop.permute.xlu0 %722
    %726 = vset.pattern.permute.xlu0 0
    %727 = vperm.xlu0 %726, %v692
    %v728 = vpop.permute.xlu0 %727
    %731 = vset.pattern.permute.xlu0 0
    %732 = vperm.xlu0 %731, %v693
    %v733 = vpop.permute.xlu0 %732
    %736 = vset.pattern.permute.xlu0 0
    %737 = vperm.xlu0 %736, %v694
    %v738 = vpop.permute.xlu0 %737
    %741 = vset.pattern.permute.xlu0 0
    %742 = vperm.xlu0 %741, %v695
    %v743 = vpop.permute.xlu0 %742
    %746 = vset.pattern.permute.xlu0 0
    %747 = vperm.xlu0 %746, %v696
    %v748 = vpop.permute.xlu0 %747
    %751 = vset.pattern.permute.xlu0 0
    %752 = vperm.xlu0 %751, %v697
    %v753 = vpop.permute.xlu0 %752
    %756 = vset.pattern.permute.xlu0 0
    %757 = vperm.xlu0 %756, %v698
    %v758 = vpop.permute.xlu0 %757
    %761 = vset.pattern.permute.xlu0 0
    %762 = vperm.xlu0 %761, %v699
    %v763 = vpop.permute.xlu0 %762
    %766 = vset.pattern.permute.xlu0 0
    %767 = vperm.xlu0 %766, %v700
    %v768 = vpop.permute.xlu0 %767
    %771 = vset.pattern.permute.xlu0 0
    %772 = vperm.xlu0 %771, %v701
    %v773 = vpop.permute.xlu0 %772
    %776 = vset.pattern.permute.xlu0 0
    %777 = vperm.xlu0 %776, %v702
    %v778 = vpop.permute.xlu0 %777
    %781 = vset.pattern.permute.xlu0 0
    %782 = vperm.xlu0 %781, %v703
    %v783 = vpop.permute.xlu0 %782
    %v785 = vmul.f32 %v672, %v708
    %v786 = vmul.f32 %v673, %v713
    %v787 = vmul.f32 %v674, %v718
    %v788 = vmul.f32 %v675, %v723
    %v789 = vmul.f32 %v676, %v728
    %v790 = vmul.f32 %v677, %v733
    %v791 = vmul.f32 %v678, %v738
    %v792 = vmul.f32 %v679, %v743
    %v793 = vmul.f32 %v680, %v748
    %v794 = vmul.f32 %v681, %v753
    %v795 = vmul.f32 %v682, %v758
    %v796 = vmul.f32 %v683, %v763
    %v797 = vmul.f32 %v684, %v768
    %v798 = vmul.f32 %v685, %v773
    %v799 = vmul.f32 %v686, %v778
    %v800 = vmul.f32 %v687, %v783
    %v801 = vadd.f32 %v785, %v786
    %v802 = vadd.f32 %v801, %v787
    %v803 = vadd.f32 %v802, %v788
    %v804 = vadd.f32 %v803, %v789
    %v805 = vadd.f32 %v804, %v790
    %v806 = vadd.f32 %v805, %v791
    %v807 = vadd.f32 %v806, %v792
    %v808 = vadd.f32 %v807, %v793
    %v809 = vadd.f32 %v808, %v794
    %v810 = vadd.f32 %v809, %v795
    %v811 = vadd.f32 %v810, %v796
    %v812 = vadd.f32 %v811, %v797
    %v813 = vadd.f32 %v812, %v798
    %v814 = vadd.f32 %v813, %v799
    %v815 = vadd.f32 %v814, %v800
    %v816 = vrot.slane %v815, 4
    %v817 = vadd.f32 %v815, %v816
    %v818 = vrot.slane %v817, 2
    %v819 = vadd.f32 %v817, %v818
    %v820 = vrot.slane %v819, 1
    %v821 = vadd.f32 %v819, %v820
    %823 = vset.pattern.permute.xlu0 0
    %824 = vperm.xlu0 %823, %v704
    %v825 = vpop.permute.xlu0 %824
    %v827 = vlaneseq
    %v828 = vshrl.u32 %v827, 7
    %v829 = vsub.s32 0, %v828
    %v830 = vrot.slane %v825, %v829
    %v831 = vadd.f32 %v821, %v830
    %832 = vst [vmem:[#allocation3] sm:$0x1] %v831
    // Predicated region
    $region30: #{tpu_custom_call.1} parent=1 // pred_check
      _
    $region31: #{tpu_custom_call.1} parent=1 // pred_check_branch
      %834 = sbr.rel (0) target = $region33
    $region32: #{tpu_custom_call.1} parent=1 // pred_region
      %s836 = ssub.s32 16, 16
      %837 = vsyncadd [#allocation4], %s836
      %s839 = sshll.u32 [#allocation3], 4
      %s840 = int_to_ptr.vmem [resolvable:$true] %s839
      %842 = dma.vmem_to_hbm [thread:$0]  %s840, 16, %s7, [#allocation4]
    $region33: #{tpu_custom_call.1} parent=1 // pred_fallthru
      _
    // Predicated region
    $region34: #{tpu_custom_call.1} parent=1 // pred_check
      _
    $region35: #{tpu_custom_call.1} parent=1 // pred_check_branch
      %844 = sbr.rel (0) target = $region37
    $region36: #{tpu_custom_call.1} parent=1 // pred_region
      %845 = dma.done [#allocation4], 16
    $region37: #{tpu_custom_call.1} parent=1 // pred_fallthru
      _
    %846 = vsyncpa [#allocation4], 1

</llo_original>
